<compile_context>
chip_gen: v7x
topology: tpu7x:2x2x1
jax: 0.10.0
libtpu: 0.0.40
codegen_flags: <defaults>
</compile_context>

<pallas_src>
import functools

import jax
import jax.numpy as jnp
from jax.experimental import pallas as pl
from jax.experimental.pallas import tpu as pltpu


def _pooling_kernel(emb_ref, mask_ref, out_ref, acc_ref, *, s_tile, n_s, guard):
    # emb_ref : (Bb, s_tile, h_tile)  source dtype
    # mask_ref: (Bb, S_pad)           float32, s/h-invariant block
    # out_ref : (Bb, h_tile)          float32
    # acc_ref : (Bb, h_tile)          float32 scratch (persists across S steps)
    s_idx = pl.program_id(2)

    @pl.when(s_idx == 0)
    def _init():
        acc_ref[...] = jnp.zeros_like(acc_ref)

    if n_s == 1:
        mask = mask_ref[...]                                   # (Bb, s_tile)
    else:
        # n_s > 1  =>  s_tile is a multiple of 128 by construction.
        start = pl.multiple_of(s_idx * s_tile, 128)
        mask = mask_ref[:, pl.ds(start, s_tile)]               # (Bb, s_tile)

    emb = emb_ref[...]                                         # keep source dtype
    mask_e = mask.astype(emb.dtype)[:, :, None]                # (Bb, s_tile, 1)
    contrib = emb * mask_e
    if guard:
        # Ragged S edge blocks may contain arbitrary garbage (even NaN/Inf) in
        # the out-of-bounds rows; their mask entries are exactly 0, so select
        # them away before they can reach the accumulator.
        contrib = jnp.where(mask_e != 0, contrib, jnp.zeros_like(contrib))
    acc_ref[...] += jnp.sum(contrib, axis=1, dtype=jnp.float32)

    @pl.when(s_idx == n_s - 1)
    def _finalize():
        cnt = jnp.sum(mask_ref[...], axis=1, keepdims=True)    # (Bb, 1) f32
        # True divide (matches torch); all-zero rows -> inf/NaN as in the ref.
        out_ref[...] = (acc_ref[...] / cnt).astype(out_ref.dtype)


def _vmem_capacity_bytes() -> int:
    try:
        return int(pltpu.get_tpu_info().vmem_capacity_bytes)
    except Exception:
        return 64 * 1024 * 1024  # conservative (v7x-sized) default


def pooling(token_embeddings: jax.Array, attention_mask: jax.Array,
            *, batch_block: int = 8, target_block_bytes=None) -> jax.Array:
    """Masked mean pooling over the sequence axis.

    token_embeddings: [B, S, H]
    attention_mask:   [B, S]  (any numeric/bool dtype)
    returns:          [B, H]  float32
    """
    B, S, H = token_embeddings.shape
    assert attention_mask.shape == (B, S)

    vmem_cap = _vmem_capacity_bytes()
    if target_block_bytes is None:
        # Bigger blocks amortize the ~0.35us fixed per-grid-step cost; the size
        # we can afford is set by VMEM (v7x: 64 MiB, v5e/v6e: 128 MiB).
        target_block_bytes = (16 if vmem_cap >= 96 * 1024 * 1024 else 10) * 1024 * 1024

    Bb = batch_block if B >= batch_block else B
    n_b = pl.cdiv(B, Bb)

    emb_itemsize = jnp.dtype(token_embeddings.dtype).itemsize

    # ---- choose h_tile ------------------------------------------------------
    s_probe = S if S < 128 else 128
    if H <= 128 or Bb * s_probe * H * emb_itemsize <= target_block_bytes:
        h_tile = H
    else:
        h_tile = (target_block_bytes // (Bb * s_probe * emb_itemsize)) // 128 * 128
        h_tile = max(128, min(h_tile, (H // 128) * 128))
    # Small-batch: split H so the "parallel" h axis can feed both v7x cores.
    if n_b < 2 and h_tile == H and H >= 256:
        h_tile = ((H // 2 + 127) // 128) * 128
    n_h = pl.cdiv(H, h_tile)

    # ---- choose s_tile (multiple of 128, or the full S when S is small) -----
    if S <= 128:
        s_tile = S
    else:
        s_tile = (target_block_bytes // (Bb * h_tile * emb_itemsize)) // 128 * 128
        s_tile = max(128, s_tile)
        if s_tile >= S:
            s_tile = S
    n_s = pl.cdiv(S, s_tile)
    S_pad = n_s * s_tile

    # Mask hygiene: f32 (safe (8,128) tiling) + zero-pad along S only (cheap).
    mask = attention_mask.astype(jnp.float32)
    if S_pad != S:
        mask = jnp.pad(mask, ((0, 0), (0, S_pad - S)))

    guard = (S % s_tile) != 0

    kernel = functools.partial(_pooling_kernel, s_tile=s_tile, n_s=n_s, guard=guard)

    # VMEM budget from the actual block sizes (double-buffered inputs/outputs).
    emb_blk = Bb * s_tile * h_tile * emb_itemsize
    mask_blk = Bb * S_pad * 4
    out_blk = Bb * max(h_tile, 128) * 4
    acc_blk = Bb * max(h_tile, 128) * 4
    vmem_needed = 2 * emb_blk + 2 * mask_blk + 2 * out_blk + acc_blk
    vmem_limit = int(min(max(int(vmem_needed * 1.3), 32 * 1024 * 1024),
                         max(32 * 1024 * 1024, vmem_cap - 16 * 1024 * 1024)))

    out = pl.pallas_call(
        kernel,
        out_shape=jax.ShapeDtypeStruct((B, H), jnp.float32),
        grid_spec=pltpu.PrefetchScalarGridSpec(
            num_scalar_prefetch=0,
            grid=(n_b, n_h, n_s),
            in_specs=[
                pl.BlockSpec((Bb, s_tile, h_tile), lambda b, h, s: (b, s, h)),
                # s/h-invariant mask block: DMA'd once per batch block.
                pl.BlockSpec((Bb, S_pad), lambda b, h, s: (b, 0)),
            ],
            out_specs=pl.BlockSpec((Bb, h_tile), lambda b, h, s: (b, h)),
            scratch_shapes=[pltpu.VMEM((Bb, h_tile), jnp.float32)],
        ),
        compiler_params=pltpu.CompilerParams(
            dimension_semantics=("parallel", "parallel", "arbitrary"),
            vmem_limit_bytes=vmem_limit,
        ),
    )(token_embeddings, mask)

    return out


def pooling_ref(token_embeddings, attention_mask):
    mask_exp = attention_mask[:, :, None].astype(jnp.float32)
    s = jnp.sum(token_embeddings.astype(jnp.float32) * mask_exp, axis=1)
    n = jnp.sum(jnp.broadcast_to(mask_exp, token_embeddings.shape), axis=1)
    return s / n


if __name__ == "__main__":
    B, S, H = 2, 8, 32
    key = jax.random.PRNGKey(0)

    token_embeddings = jax.random.normal(key, (B, S, H), dtype=jnp.float32)
    # Deterministic attention mask with varying valid lengths per batch row.
    lengths = jnp.array([S, S // 2], dtype=jnp.int32)            # [8, 4]
    attention_mask = (jnp.arange(S)[None, :] < lengths[:, None]).astype(jnp.int32)

    out = pooling(token_embeddings, attention_mask)
    out = jax.block_until_ready(out)

    ref = pooling_ref(token_embeddings, attention_mask)
    assert out.shape == (B, H)
    assert jnp.allclose(out, ref, atol=1e-5, rtol=1e-5), "mismatch vs reference"

    print("KERNEL_OK")
</pallas_src>

<mosaic_0001>
module attributes {stable_mosaic.version = 11 : i64} {
  func.func @_pooling_kernel(%arg0: i32, %arg1: i32, %arg2: i32, %arg3: memref<2x8x32xf32, #tpu.memory_space<vmem>>, %arg4: memref<2x8xf32, #tpu.memory_space<vmem>>, %arg5: memref<2x32xf32, #tpu.memory_space<vmem>>, %arg6: memref<2x32xf32, #tpu.memory_space<vmem>>) attributes {dimension_semantics = [#tpu.dimension_semantics<parallel>, #tpu.dimension_semantics<parallel>, #tpu.dimension_semantics<arbitrary>], iteration_bounds = array<i64: 1, 1, 1>, scalar_prefetch = 0 : i64, scratch_operands = 1 : i64, tpu.core_type = #tpu.core_type<tc>, window_params = [{transform_indices = @transform_0, window_bounds = array<i64: 2, 8, 32>}, {transform_indices = @transform_1, window_bounds = array<i64: 2, 8>}, {transform_indices = @transform_2, window_bounds = array<i64: 2, 32>}]} {
    %c0_i32 = arith.constant 0 : i32
    %0 = arith.cmpi eq, %arg2, %c0_i32 : i32
    %1 = arith.extui %0 : i1 to i32
    %c0_i32_0 = arith.constant 0 : i32
    %2 = arith.cmpi ne, %1, %c0_i32_0 : i32
    scf.if %2 {
      %cst_11 = arith.constant 0.000000e+00 : f32
      %15 = vector.broadcast %cst_11 : f32 to vector<2x32xf32>
      %c0_12 = arith.constant 0 : index
      %c0_13 = arith.constant 0 : index
      %16 = vector.load %arg6[%c0_12, %c0_13] : memref<2x32xf32, #tpu.memory_space<vmem>>, vector<2x32xf32>
      tpu.vector_store %arg6[%c0_12, %c0_13], %15 {strides = array<i32>} : memref<2x32xf32, #tpu.memory_space<vmem>>, vector<2x32xf32>,
    } else {
    }
    %c0 = arith.constant 0 : index
    %c0_1 = arith.constant 0 : index
    %3 = vector.load %arg4[%c0, %c0_1] : memref<2x8xf32, #tpu.memory_space<vmem>>, vector<2x8xf32>
    %c0_2 = arith.constant 0 : index
    %c0_3 = arith.constant 0 : index
    %c0_4 = arith.constant 0 : index
    %4 = vector.load %arg3[%c0_2, %c0_3, %c0_4] : memref<2x8x32xf32, #tpu.memory_space<vmem>>, vector<2x8x32xf32>
    %5 = vector.shape_cast %3 : vector<2x8xf32> to vector<2x8x1xf32>
    %6 = vector.broadcast %5 : vector<2x8x1xf32> to vector<2x8x32xf32>
    %7 = arith.mulf %4, %6 : vector<2x8x32xf32>
    %c0_5 = arith.constant 0 : index
    %c0_6 = arith.constant 0 : index
    %8 = vector.load %arg6[%c0_5, %c0_6] : memref<2x32xf32, #tpu.memory_space<vmem>>, vector<2x32xf32>
    %cst = arith.constant dense<0.000000e+00> : vector<2x32xf32>
    %9 = vector.multi_reduction <add>, %7, %cst [1] : vector<2x8x32xf32> to vector<2x32xf32>
    %10 = arith.addf %8, %9 : vector<2x32xf32>
    %c0_7 = arith.constant 0 : index
    %c0_8 = arith.constant 0 : index
    %11 = vector.load %arg6[%c0_7, %c0_8] : memref<2x32xf32, #tpu.memory_space<vmem>>, vector<2x32xf32>
    tpu.vector_store %arg6[%c0_7, %c0_8], %10 {strides = array<i32>} : memref<2x32xf32, #tpu.memory_space<vmem>>, vector<2x32xf32>,
    %c0_i32_9 = arith.constant 0 : i32
    %12 = arith.cmpi eq, %arg2, %c0_i32_9 : i32
    %13 = arith.extui %12 : i1 to i32
    %c0_i32_10 = arith.constant 0 : i32
    %14 = arith.cmpi ne, %13, %c0_i32_10 : i32
    scf.if %14 {
      %c0_11 = arith.constant 0 : index
      %c0_12 = arith.constant 0 : index
      %15 = vector.load %arg4[%c0_11, %c0_12] : memref<2x8xf32, #tpu.memory_space<vmem>>, vector<2x8xf32>
      %cst_13 = arith.constant dense<0.000000e+00> : vector<2xf32>
      %16 = vector.multi_reduction <add>, %15, %cst_13 [1] : vector<2x8xf32> to vector<2xf32>
      %17 = vector.shape_cast %16 : vector<2xf32> to vector<2x1xf32>
      %c0_14 = arith.constant 0 : index
      %c0_15 = arith.constant 0 : index
      %18 = vector.load %arg6[%c0_14, %c0_15] : memref<2x32xf32, #tpu.memory_space<vmem>>, vector<2x32xf32>
      %19 = vector.broadcast %17 : vector<2x1xf32> to vector<2x32xf32>
      %20 = arith.divf %18, %19 : vector<2x32xf32>
      %c0_16 = arith.constant 0 : index
      %c0_17 = arith.constant 0 : index
      %21 = vector.load %arg5[%c0_16, %c0_17] : memref<2x32xf32, #tpu.memory_space<vmem>>, vector<2x32xf32>
      tpu.vector_store %arg5[%c0_16, %c0_17], %20 {strides = array<i32>} : memref<2x32xf32, #tpu.memory_space<vmem>>, vector<2x32xf32>,
    } else {
    }
    return
  }
  func.func @transform_0(%arg0: i32, %arg1: i32, %arg2: i32) -> (i32, i32, i32) {
    %c0_i32 = arith.constant 0 : i32
    return %arg0, %arg2, %arg1 : i32, i32, i32
  }
  func.func @transform_1(%arg0: i32, %arg1: i32, %arg2: i32) -> (i32, i32) {
    %c0_i32 = arith.constant 0 : i32
    %c0_i32_0 = arith.constant 0 : i32
    return %arg0, %c0_i32 : i32, i32
  }
  func.func @transform_2(%arg0: i32, %arg1: i32, %arg2: i32) -> (i32, i32) {
    %c0_i32 = arith.constant 0 : i32
    return %arg0, %arg1 : i32, i32
  }
}

</mosaic_0001>

<llo_original>
// kernel: tpu_custom_call.1
$region0: #{tpu_custom_call.1}
  #allocation0 [shape = 'u32[]', space=smem, size = 0x4, offset = 0x4, fixed_abs, tag = 'smem constant byte address 0x4 - core index']
  #allocation1 [shape = 'u32[144,128]{1,0:T(1,128)}', space=vmem, size = 0x12000, scoped, tag = 'internal scratch']
  #allocation2 [shape = 'f32[2,32]{1,0:T(2,128)}', space=vmem, size = 0x400, scoped, tag = 'scratch operand']
  %s0 = inlined_call_operand.hbm [shape: f32[2,8,32], index: 0, kind: input, shape index: {}]
  %s1 = inlined_call_operand.vmem [shape: f32[2,8], index: 1, kind: input, shape index: {}]
  %s2 = inlined_call_operand.hbm [shape: f32[2,32], index: 2, kind: output, shape index: {}]
  %s3 = sld [smem:[#allocation0]]
  $region30: #{tpu_custom_call.1} parent=0
    _
  %s5 = ssub.s32 1, %s3
  %s6 = scalar_select 0, %s5, %s3
  $region1: #{tpu_custom_call.1} parent=0
    #allocation3 [shape = 'u8[8192]{0}', space=vmem, size = 0x2000, scoped, tag = 'input window, operand 0, single buffered']
    #allocation4 [shape = 's32[1]{0}', space=sflag, size = 0x4, scoped, tag = 'scoped memory for tpu_custom_call.1']
    #allocation5 [shape = 's32[1]{0}', space=sflag, size = 0x4, scoped, tag = 'scoped memory for tpu_custom_call.1']
    #allocation6 [shape = 'u8[1024]{0}', space=vmem, size = 0x400, scoped, tag = 'output window, operand 0, single buffered']
    %7 = vsyncpa [#allocation4], 0
    %8 = vsyncpa [#allocation5], 0
    // Predicated region
    $region2: #{tpu_custom_call.1} parent=1 // pred_check
      _
    $region3: #{tpu_custom_call.1} parent=1 // pred_check_branch
      %10 = sbr.rel (0) target = $region5
    $region4: #{tpu_custom_call.1} parent=1 // pred_region
      %s12 = ssub.s32 256, 256
      %13 = vsyncadd [#allocation4], %s12
      %s14 = sshll.u32 [#allocation3], 4
      %s15 = int_to_ptr.vmem [resolvable:$true] %s14
      %20 = dma.hbm_to_vmem [thread:$0]  %s0, 256, %s15, [#allocation4], 128, 128, 8
    $region5: #{tpu_custom_call.1} parent=1 // pred_fallthru
      _
    // Predicated region
    $region6: #{tpu_custom_call.1} parent=1 // pred_check
      _
    $region7: #{tpu_custom_call.1} parent=1 // pred_check_branch
      %22 = sbr.rel (0) target = $region9
    $region8: #{tpu_custom_call.1} parent=1 // pred_region
      _
    $region9: #{tpu_custom_call.1} parent=1 // pred_fallthru
      _
    // Predicated region
    $region10: #{tpu_custom_call.1} parent=1 // pred_check
      _
    $region11: #{tpu_custom_call.1} parent=1 // pred_check_branch
      %24 = sbr.rel (0) target = $region13
    $region12: #{tpu_custom_call.1} parent=1 // pred_region
      %25 = dma.done [#allocation4], 256
    $region13: #{tpu_custom_call.1} parent=1 // pred_fallthru
      _
    %p26 = scmp.eq.s32.totalorder 0, 0
    // Predicated region
    $region14: #{tpu_custom_call.1} parent=1 // pred_check
      %p27 = pneg %p26
    $region15: #{tpu_custom_call.1} parent=1 // pred_check_branch
      %29 = sbr.rel (%p27) target = $region17
    $region16: #{tpu_custom_call.1} parent=1 // pred_region
      %vm30 = vcmask 254976
      %31 = vst.msk [vmem:[#allocation2] sm:$0x3] %vm30, 0.0
    $region17: #{tpu_custom_call.1} parent=1 // pred_fallthru
      _
    %v32 = vld [vmem:[%s1] sm:$0x3]
    %v33 = vld [vmem:[#allocation3] sm:$0xff]
    %v34 = vld [vmem:[#allocation3 + $0x8] sm:$0xff]
    %v35 = vlaneseq
    %v36 = vshrl.u32 %v35, 7
    %v37 = vsub.s32 0, %v36
    %v38 = vrot.slane %v32, %v37
    %40 = vbcast.lane.b32.xlu0 %v38, 256
    %v41 = vpop.permute.xlu0 %40
    %v42 = vlaneseq
    %v43 = vshrl.u32 %v42, 7
    %v44 = vsub.s32 1, %v43
    %v45 = vrot.slane %v32, %v44
    %47 = vbcast.lane.b32.xlu0 %v45, 256
    %v48 = vpop.permute.xlu0 %47
    %v49 = vmul.f32 %v33, %v41
    %v50 = vmul.f32 %v34, %v48
    %v51 = vld [vmem:[#allocation2] sm:$0x3]
    %vm52 = vcmask 261120
    %v53 = vsel %vm52, %v49, 0.0
    %v54 = vrot.slane %v53, 4
    %v55 = vadd.f32 %v53, %v54
    %v56 = vrot.slane %v55, 2
    %v57 = vadd.f32 %v55, %v56
    %v58 = vrot.slane %v57, 1
    %v59 = vadd.f32 %v57, %v58
    %v60 = vsel %vm52, %v50, 0.0
    %v61 = vrot.slane %v60, 4
    %v62 = vadd.f32 %v60, %v61
    %v63 = vrot.slane %v62, 2
    %v64 = vadd.f32 %v62, %v63
    %v65 = vrot.slane %v64, 1
    %v66 = vadd.f32 %v64, %v65
    %vm69 = vcmask 1041409
    %v70 = vsel %vm69, %v66, %v59
    %v72 = vadd.f32 %v51, %v70
    %vm73 = vcmask 254976
    %74 = vst.msk [vmem:[#allocation2] sm:$0x3] %vm73, %v72
    // Predicated region
    $region18: #{tpu_custom_call.1} parent=1 // pred_check
      %p75 = pneg %p26
    $region19: #{tpu_custom_call.1} parent=1 // pred_check_branch
      %77 = sbr.rel (%p75) target = $region21
    $region20: #{tpu_custom_call.1} parent=1 // pred_region
      %v78 = vld [vmem:[%s1] sm:$0x3]
      %vm79 = vcmask 58368
      %v80 = vsel %vm79, %v78, 0.0
      %81 = vadd.xlane.f32.xlu0 %v80
      %v82 = vpop.xlane.xlu0 %81
      %v83 = vld [vmem:[#allocation2] sm:$0x3]
      %v84 = vrcp.pop %v82
      %v85 = vmul.f32 %v83, %v84
      %86 = vst.msk [vmem:[#allocation6] sm:$0x3] %vm73, %v85
    $region21: #{tpu_custom_call.1} parent=1 // pred_fallthru
      _
    // Predicated region
    $region22: #{tpu_custom_call.1} parent=1 // pred_check
      _
    $region23: #{tpu_custom_call.1} parent=1 // pred_check_branch
      %88 = sbr.rel (0) target = $region25
    $region24: #{tpu_custom_call.1} parent=1 // pred_region
      %s90 = ssub.s32 32, 32
      %91 = vsyncadd [#allocation5], %s90
      %s93 = sshll.u32 [#allocation6], 4
      %s94 = int_to_ptr.vmem [resolvable:$true] %s93
      %96 = dma.vmem_to_hbm [thread:$0]  %s94, 32, %s2, [#allocation5]
    $region25: #{tpu_custom_call.1} parent=1 // pred_fallthru
      _
    // Predicated region
    $region26: #{tpu_custom_call.1} parent=1 // pred_check
      _
    $region27: #{tpu_custom_call.1} parent=1 // pred_check_branch
      %98 = sbr.rel (0) target = $region29
    $region28: #{tpu_custom_call.1} parent=1 // pred_region
      %99 = dma.done [#allocation5], 32
    $region29: #{tpu_custom_call.1} parent=1 // pred_fallthru
      _
    %100 = vsyncpa [#allocation4], 1
    %101 = vsyncpa [#allocation5], 1

</llo_original>
